<compile_context>
chip_gen: v7x
topology: tpu7x:2x2x1
jax: 0.10.0
libtpu: 0.0.40
codegen_flags: <defaults>
</compile_context>

<pallas_src>
import functools

import jax
import jax.numpy as jnp
from jax.experimental import pallas as pl
from jax.experimental.pallas import tpu as pltpu


def _round_up(x, m):
    return (x + m - 1) // m * m


def _fused_mlp_kernel(*refs, num_layers):
    """One batch tile through ALL layers; activations never leave VMEM/vregs.

    refs = (x_ref, w_0..w_{L-1}, b_0..b_{L-1}, o_ref)
      x_ref : (tm, in_pad)        f32 activation tile (pipelined over batch)
      w_l   : (K_pad_l, N_pad_l)  bf16 weights, whole-array resident in VMEM
      b_l   : (1, N_pad_l)        f32 biases, whole-array resident in VMEM
      o_ref : (tm, out_pad)       f32 output tile
    """
    x_ref = refs[0]
    w_refs = refs[1:1 + num_layers]
    b_refs = refs[1 + num_layers:1 + 2 * num_layers]
    o_ref = refs[1 + 2 * num_layers]

    h = x_ref[...].astype(jnp.bfloat16)            # bf16 operands feed the MXU
    for l in range(num_layers):                    # static, fully unrolled
        acc = jnp.dot(h, w_refs[l][...],
                      preferred_element_type=jnp.float32)   # f32 accumulate
        acc = acc + b_refs[l][...]                 # f32 bias add on the VPU
        if l < num_layers - 1:
            h = jnp.maximum(acc, 0.0).astype(jnp.bfloat16)  # ReLU, bf16 carry
        else:
            h = acc                                # no ReLU on the last layer
    o_ref[...] = h.astype(o_ref.dtype)


def init_mlp_params(key, input_d, structure, output_d, dtype=jnp.float32):
    """Matches PyTorch nn.Linear default init; weights stored as (in, out)."""
    struc = [input_d] + list(structure) + [output_d]
    params = []
    for i in range(len(struc) - 1):
        fan_in, fan_out = struc[i], struc[i + 1]
        key, kw, kb = jax.random.split(key, 3)
        bound = 1.0 / (fan_in ** 0.5)
        w = jax.random.uniform(kw, (fan_in, fan_out), dtype, -bound, bound)
        b = jax.random.uniform(kb, (fan_out,), dtype, -bound, bound)
        params.append((w, b))
    return params


def pack_mlp_params(params, w_dtype=jnp.bfloat16, b_dtype=jnp.float32):
    """Per-layer zero padding: layer l (K_l, N_l) -> (rup128(K_l), rup128(N_l)).

    Padded weight rows/cols and bias lanes are exactly 0, so padded activation
    lanes stay 0 through matmul + bias + ReLU at every layer and the valid
    slice of the output equals the unpadded math. Done once at init time.
    """
    dims = [params[0][0].shape[0]] + [w.shape[1] for (w, _) in params]
    pads = [_round_up(d, 128) for d in dims]
    w_list, b_list = [], []
    for l, (w, b) in enumerate(params):
        kp, npad = pads[l], pads[l + 1]
        wp = jnp.zeros((kp, npad), w_dtype).at[:w.shape[0], :w.shape[1]].set(
            w.astype(w_dtype))
        bp = jnp.zeros((1, npad), b_dtype).at[0, :b.shape[0]].set(
            b.astype(b_dtype))
        w_list.append(wp)
        b_list.append(bp)
    return w_list, b_list, dims, pads


def mlp_forward(x, w_list, b_list, dims, pads, *, tm=None):
    """Fused MLP forward: y = Linear_L(ReLU(...ReLU(Linear_1(x))...))."""
    M = x.shape[0]
    L = len(w_list)
    input_d, output_d = dims[0], dims[-1]
    in_pad, out_pad = pads[0], pads[-1]

    if tm is None:
        if M <= 16:
            tm = 16                      # single tile; batch too small to split
        else:
            # >=2 grid steps so both v7x TensorCores get a tile; 256 cap feeds
            # the 256-wide MXUs on v6e/v7x; multiple of 16 for bf16 packing.
            tm = min(256, _round_up(-(-M // 2), 16))
    m_pad = _round_up(M, tm)

    # Pad activations; padded rows/lanes are zero (see pack_mlp_params note).
    x_p = jnp.zeros((m_pad, in_pad), x.dtype).at[:M, :input_d].set(x)

    itemsize = lambda a: jnp.dtype(a.dtype).itemsize
    param_bytes = (sum(w.size * itemsize(w) for w in w_list)
                   + sum(b.size * itemsize(b) for b in b_list))
    io_bytes = 2 * tm * in_pad * 4 + 2 * tm * out_pad * 4   # dbl-buffered I/O
    act_bytes = 2 * tm * max(pads) * 4                      # live activations
    vmem_need = param_bytes + io_bytes + act_bytes

    try:
        vmem_cap = pltpu.get_tpu_info().vmem_capacity_bytes
    except Exception:
        vmem_cap = 64 << 20             # conservative fallback (v7x per-TC)
    vmem_limit = int(min(max(2 * vmem_need, 8 << 20), int(0.65 * vmem_cap)))

    flops = 2 * M * sum(dims[l] * dims[l + 1] for l in range(L))
    bytes_accessed = int(x.size * itemsize(x) + M * output_d * 4 + param_bytes)
    cost = pl.CostEstimate(flops=int(flops), transcendentals=0,
                           bytes_accessed=bytes_accessed)

    kernel = functools.partial(_fused_mlp_kernel, num_layers=L)
    # Whole-array VMEM residency for params: fetched once, single-buffered
    # (no 2x pipeline buffers for grid-invariant inputs).
    resident = pl.BlockSpec(memory_space=pltpu.MemorySpace.VMEM)

    out = pl.pallas_call(
        kernel,
        out_shape=jax.ShapeDtypeStruct((m_pad, out_pad), x.dtype),
        grid=(m_pad // tm,),
        in_specs=[pl.BlockSpec((tm, in_pad), lambda i: (i, 0))]
                 + [resident] * (2 * L),
        out_specs=pl.BlockSpec((tm, out_pad), lambda i: (i, 0)),
        compiler_params=pltpu.CompilerParams(
            dimension_semantics=("parallel",),   # shard batch tiles across TCs
            vmem_limit_bytes=vmem_limit,
        ),
        cost_estimate=cost,
    )(x_p, *w_list, *b_list)

    return out[:M, :output_d]


def mlp_reference(params, x):
    n = len(params)
    for i, (w, b) in enumerate(params):
        x = x @ w + b
        if i < n - 1:
            x = jnp.maximum(x, 0.0)
    return x


if __name__ == "__main__":
    key = jax.random.PRNGKey(0)
    kx, kp = jax.random.split(key)

    batch = 8
    input_d, structure, output_d = 32, [64, 48], 16

    x = jax.random.normal(kx, (batch, input_d), jnp.float32)
    params = init_mlp_params(kp, input_d, structure, output_d)
    w_list, b_list, dims, pads = pack_mlp_params(params)

    y = mlp_forward(x, w_list, b_list, dims, pads)
    y = jax.block_until_ready(y)

    y_ref = mlp_reference(params, x)
    assert y.shape == (batch, output_d)
    # bf16 MXU operands with f32 accumulation -> relaxed tolerance vs f32 ref.
    assert jnp.allclose(y, y_ref, atol=5e-2, rtol=5e-2), "mismatch vs reference"

    print("KERNEL_OK")
</pallas_src>

<mosaic_0001>
module attributes {stable_mosaic.version = 11 : i64} {
  func.func @_fused_mlp_kernel(%arg0: i32, %arg1: memref<16x128xf32, #tpu.memory_space<vmem>>, %arg2: memref<128x128xbf16, #tpu.memory_space<vmem>>, %arg3: memref<128x128xbf16, #tpu.memory_space<vmem>>, %arg4: memref<128x128xbf16, #tpu.memory_space<vmem>>, %arg5: memref<1x128xf32, #tpu.memory_space<vmem>>, %arg6: memref<1x128xf32, #tpu.memory_space<vmem>>, %arg7: memref<1x128xf32, #tpu.memory_space<vmem>>, %arg8: memref<16x128xf32, #tpu.memory_space<vmem>>) attributes {dimension_semantics = [#tpu.dimension_semantics<parallel>], iteration_bounds = array<i64: 1>, scalar_prefetch = 0 : i64, scratch_operands = 0 : i64, tpu.core_type = #tpu.core_type<tc>, window_params = [{transform_indices = @transform_0, window_bounds = array<i64: 16, 128>}, {pipeline_mode = #tpu.pipeline_mode<synchronous>, transform_indices = @transform_1, window_bounds = array<i64: 128, 128>}, {pipeline_mode = #tpu.pipeline_mode<synchronous>, transform_indices = @transform_2, window_bounds = array<i64: 128, 128>}, {pipeline_mode = #tpu.pipeline_mode<synchronous>, transform_indices = @transform_3, window_bounds = array<i64: 128, 128>}, {pipeline_mode = #tpu.pipeline_mode<synchronous>, transform_indices = @transform_4, window_bounds = array<i64: 1, 128>}, {pipeline_mode = #tpu.pipeline_mode<synchronous>, transform_indices = @transform_5, window_bounds = array<i64: 1, 128>}, {pipeline_mode = #tpu.pipeline_mode<synchronous>, transform_indices = @transform_6, window_bounds = array<i64: 1, 128>}, {transform_indices = @transform_7, window_bounds = array<i64: 16, 128>}]} {
    %c0 = arith.constant 0 : index
    %c0_0 = arith.constant 0 : index
    %0 = vector.load %arg1[%c0, %c0_0] : memref<16x128xf32, #tpu.memory_space<vmem>>, vector<16x128xf32>
    %1 = arith.truncf %0 : vector<16x128xf32> to vector<16x128xbf16>
    %c0_1 = arith.constant 0 : index
    %c0_2 = arith.constant 0 : index
    %2 = vector.load %arg2[%c0_1, %c0_2] : memref<128x128xbf16, #tpu.memory_space<vmem>>, vector<128x128xbf16>
    %cst = arith.constant dense<0.000000e+00> : vector<16x128xf32>
    %3 = tpu.matmul %1, %2, %cst {dimension_numbers = #tpu.dot_dimension_numbers<[1], [0], [0], [1], [0, 0, 1, 1], [], []>} : vector<16x128xbf16>, vector<128x128xbf16>, vector<16x128xf32> -> vector<16x128xf32>
    %c0_3 = arith.constant 0 : index
    %c0_4 = arith.constant 0 : index
    %4 = vector.load %arg5[%c0_3, %c0_4] : memref<1x128xf32, #tpu.memory_space<vmem>>, vector<1x128xf32>
    %5 = vector.broadcast %4 : vector<1x128xf32> to vector<16x128xf32>
    %6 = arith.addf %3, %5 : vector<16x128xf32>
    %cst_5 = arith.constant 0.000000e+00 : f32
    %7 = vector.broadcast %cst_5 : f32 to vector<16x128xf32>
    %8 = arith.maximumf %6, %7 : vector<16x128xf32>
    %9 = arith.truncf %8 : vector<16x128xf32> to vector<16x128xbf16>
    %c0_6 = arith.constant 0 : index
    %c0_7 = arith.constant 0 : index
    %10 = vector.load %arg3[%c0_6, %c0_7] : memref<128x128xbf16, #tpu.memory_space<vmem>>, vector<128x128xbf16>
    %cst_8 = arith.constant dense<0.000000e+00> : vector<16x128xf32>
    %11 = tpu.matmul %9, %10, %cst_8 {dimension_numbers = #tpu.dot_dimension_numbers<[1], [0], [0], [1], [0, 0, 1, 1], [], []>} : vector<16x128xbf16>, vector<128x128xbf16>, vector<16x128xf32> -> vector<16x128xf32>
    %c0_9 = arith.constant 0 : index
    %c0_10 = arith.constant 0 : index
    %12 = vector.load %arg6[%c0_9, %c0_10] : memref<1x128xf32, #tpu.memory_space<vmem>>, vector<1x128xf32>
    %13 = vector.broadcast %12 : vector<1x128xf32> to vector<16x128xf32>
    %14 = arith.addf %11, %13 : vector<16x128xf32>
    %cst_11 = arith.constant 0.000000e+00 : f32
    %15 = vector.broadcast %cst_11 : f32 to vector<16x128xf32>
    %16 = arith.maximumf %14, %15 : vector<16x128xf32>
    %17 = arith.truncf %16 : vector<16x128xf32> to vector<16x128xbf16>
    %c0_12 = arith.constant 0 : index
    %c0_13 = arith.constant 0 : index
    %18 = vector.load %arg4[%c0_12, %c0_13] : memref<128x128xbf16, #tpu.memory_space<vmem>>, vector<128x128xbf16>
    %cst_14 = arith.constant dense<0.000000e+00> : vector<16x128xf32>
    %19 = tpu.matmul %17, %18, %cst_14 {dimension_numbers = #tpu.dot_dimension_numbers<[1], [0], [0], [1], [0, 0, 1, 1], [], []>} : vector<16x128xbf16>, vector<128x128xbf16>, vector<16x128xf32> -> vector<16x128xf32>
    %c0_15 = arith.constant 0 : index
    %c0_16 = arith.constant 0 : index
    %20 = vector.load %arg7[%c0_15, %c0_16] : memref<1x128xf32, #tpu.memory_space<vmem>>, vector<1x128xf32>
    %21 = vector.broadcast %20 : vector<1x128xf32> to vector<16x128xf32>
    %22 = arith.addf %19, %21 : vector<16x128xf32>
    %c0_17 = arith.constant 0 : index
    %c0_18 = arith.constant 0 : index
    %23 = vector.load %arg8[%c0_17, %c0_18] : memref<16x128xf32, #tpu.memory_space<vmem>>, vector<16x128xf32>
    tpu.vector_store %arg8[%c0_17, %c0_18], %22 {strides = array<i32>} : memref<16x128xf32, #tpu.memory_space<vmem>>, vector<16x128xf32>,
    return
  }
  func.func @transform_0(%arg0: i32) -> (i32, i32) {
    %c0_i32 = arith.constant 0 : i32
    %c0_i32_0 = arith.constant 0 : i32
    return %arg0, %c0_i32 : i32, i32
  }
  func.func @transform_1(%arg0: i32) -> (i32, i32) {
    %c0_i32 = arith.constant 0 : i32
    %c0_i32_0 = arith.constant 0 : i32
    %c0_i32_1 = arith.constant 0 : i32
    return %c0_i32, %c0_i32_0 : i32, i32
  }
  func.func @transform_2(%arg0: i32) -> (i32, i32) {
    %c0_i32 = arith.constant 0 : i32
    %c0_i32_0 = arith.constant 0 : i32
    %c0_i32_1 = arith.constant 0 : i32
    return %c0_i32, %c0_i32_0 : i32, i32
  }
  func.func @transform_3(%arg0: i32) -> (i32, i32) {
    %c0_i32 = arith.constant 0 : i32
    %c0_i32_0 = arith.constant 0 : i32
    %c0_i32_1 = arith.constant 0 : i32
    return %c0_i32, %c0_i32_0 : i32, i32
  }
  func.func @transform_4(%arg0: i32) -> (i32, i32) {
    %c0_i32 = arith.constant 0 : i32
    %c0_i32_0 = arith.constant 0 : i32
    %c0_i32_1 = arith.constant 0 : i32
    return %c0_i32, %c0_i32_0 : i32, i32
  }
  func.func @transform_5(%arg0: i32) -> (i32, i32) {
    %c0_i32 = arith.constant 0 : i32
    %c0_i32_0 = arith.constant 0 : i32
    %c0_i32_1 = arith.constant 0 : i32
    return %c0_i32, %c0_i32_0 : i32, i32
  }
  func.func @transform_6(%arg0: i32) -> (i32, i32) {
    %c0_i32 = arith.constant 0 : i32
    %c0_i32_0 = arith.constant 0 : i32
    %c0_i32_1 = arith.constant 0 : i32
    return %c0_i32, %c0_i32_0 : i32, i32
  }
  func.func @transform_7(%arg0: i32) -> (i32, i32) {
    %c0_i32 = arith.constant 0 : i32
    %c0_i32_0 = arith.constant 0 : i32
    return %arg0, %c0_i32 : i32, i32
  }
}

</mosaic_0001>

<llo_original>
// kernel: tpu_custom_call.1
$region0: #{tpu_custom_call.1}
  #allocation0 [shape = 'u32[]', space=smem, size = 0x4, offset = 0x4, fixed_abs, tag = 'smem constant byte address 0x4 - core index']
  #allocation1 [shape = 'u32[144,128]{1,0:T(1,128)}', space=vmem, size = 0x12000, scoped, tag = 'internal scratch']
  %s0 = inlined_call_operand.hbm [shape: f32[16,128], index: 0, kind: input, shape index: {}]
  %s1 = inlined_call_operand.hbm [shape: bf16[128,128], index: 1, kind: input, shape index: {}]
  %s2 = inlined_call_operand.hbm [shape: bf16[128,128], index: 2, kind: input, shape index: {}]
  %s3 = inlined_call_operand.hbm [shape: bf16[128,128], index: 3, kind: input, shape index: {}]
  %s4 = inlined_call_operand.vmem [shape: f32[1,128], index: 4, kind: input, shape index: {}]
  %s5 = inlined_call_operand.vmem [shape: f32[1,128], index: 5, kind: input, shape index: {}]
  %s6 = inlined_call_operand.vmem [shape: f32[1,128], index: 6, kind: input, shape index: {}]
  %s7 = inlined_call_operand.hbm [shape: f32[16,128], index: 7, kind: output, shape index: {}]
  %s8 = sld [smem:[#allocation0]]
  $region54: #{tpu_custom_call.1} parent=0
    _
  %s10 = ssub.s32 1, %s8
  %s11 = scalar_select 0, %s10, %s8
  $region1: #{tpu_custom_call.1} parent=0
    #allocation2 [shape = 'u8[8192]{0}', space=vmem, size = 0x2000, scoped, tag = 'input window, operand 0, single buffered']
    #allocation3 [shape = 's32[1]{0}', space=sflag, size = 0x4, scoped, tag = 'scoped memory for tpu_custom_call.1']
    #allocation4 [shape = 's32[1]{0}', space=sflag, size = 0x4, scoped, tag = 'scoped memory for tpu_custom_call.1']
    #allocation5 [shape = 'u8[32768]{0}', space=vmem, size = 0x8000, scoped, tag = 'input window, operand 1, single buffered']
    #allocation6 [shape = 's32[1]{0}', space=sflag, size = 0x4, scoped, tag = 'scoped memory for tpu_custom_call.1']
    #allocation7 [shape = 'u8[32768]{0}', space=vmem, size = 0x8000, scoped, tag = 'input window, operand 2, single buffered']
    #allocation8 [shape = 'u8[32768]{0}', space=vmem, size = 0x8000, scoped, tag = 'input window, operand 3, single buffered']
    #allocation9 [shape = 's32[1]{0}', space=sflag, size = 0x4, scoped, tag = 'scoped memory for tpu_custom_call.1']
    #allocation10 [shape = 'u8[8192]{0}', space=vmem, size = 0x2000, scoped, tag = 'output window, operand 0, single buffered']
    %12 = vsyncpa [#allocation3], 0
    %13 = vsyncpa [#allocation6], 0
    %14 = vsyncpa [#allocation9], 0
    %15 = vsyncpa [#allocation4], 0
    // Predicated region
    $region2: #{tpu_custom_call.1} parent=1 // pred_check
      _
    $region3: #{tpu_custom_call.1} parent=1 // pred_check_branch
      %17 = sbr.rel (0) target = $region5
    $region4: #{tpu_custom_call.1} parent=1 // pred_region
      %s19 = ssub.s32 256, 256
      %20 = vsyncadd [#allocation3], %s19
      %s21 = sshll.u32 [#allocation2], 4
      %s22 = int_to_ptr.vmem [resolvable:$true] %s21
      %27 = dma.hbm_to_vmem [thread:$0]  %s0, 256, %s22, [#allocation3], 128, 128, 8
    $region5: #{tpu_custom_call.1} parent=1 // pred_fallthru
      _
    // Predicated region
    $region6: #{tpu_custom_call.1} parent=1 // pred_check
      _
    $region7: #{tpu_custom_call.1} parent=1 // pred_check_branch
      %29 = sbr.rel (0) target = $region9
    $region8: #{tpu_custom_call.1} parent=1 // pred_region
      %s31 = ssub.s32 1024, 1024
      %32 = vsyncadd [#allocation6], %s31
      %s33 = sshll.u32 [#allocation5], 4
      %s34 = int_to_ptr.vmem [resolvable:$true] %s33
      %39 = dma.hbm_to_vmem [thread:$0]  %s1, 1024, %s34, [#allocation6], 64, 64, 4
    $region9: #{tpu_custom_call.1} parent=1 // pred_fallthru
      _
    // Predicated region
    $region10: #{tpu_custom_call.1} parent=1 // pred_check
      _
    $region11: #{tpu_custom_call.1} parent=1 // pred_check_branch
      %41 = sbr.rel (0) target = $region13
    $region12: #{tpu_custom_call.1} parent=1 // pred_region
      %s43 = ssub.s32 1024, 1024
      %44 = vsyncadd [#allocation6], %s43
      %s45 = sshll.u32 [#allocation7], 4
      %s46 = int_to_ptr.vmem [resolvable:$true] %s45
      %51 = dma.hbm_to_vmem [thread:$0]  %s2, 1024, %s46, [#allocation6], 64, 64, 4
    $region13: #{tpu_custom_call.1} parent=1 // pred_fallthru
      _
    // Predicated region
    $region14: #{tpu_custom_call.1} parent=1 // pred_check
      _
    $region15: #{tpu_custom_call.1} parent=1 // pred_check_branch
      %53 = sbr.rel (0) target = $region17
    $region16: #{tpu_custom_call.1} parent=1 // pred_region
      %s55 = ssub.s32 1024, 1024
      %56 = vsyncadd [#allocation9], %s55
      %s57 = sshll.u32 [#allocation8], 4
      %s58 = int_to_ptr.vmem [resolvable:$true] %s57
      %63 = dma.hbm_to_vmem [thread:$0]  %s3, 1024, %s58, [#allocation9], 64, 64, 4
    $region17: #{tpu_custom_call.1} parent=1 // pred_fallthru
      _
    // Predicated region
    $region18: #{tpu_custom_call.1} parent=1 // pred_check
      _
    $region19: #{tpu_custom_call.1} parent=1 // pred_check_branch
      %65 = sbr.rel (0) target = $region21
    $region20: #{tpu_custom_call.1} parent=1 // pred_region
      _
    $region21: #{tpu_custom_call.1} parent=1 // pred_fallthru
      _
    // Predicated region
    $region22: #{tpu_custom_call.1} parent=1 // pred_check
      _
    $region23: #{tpu_custom_call.1} parent=1 // pred_check_branch
      %67 = sbr.rel (0) target = $region25
    $region24: #{tpu_custom_call.1} parent=1 // pred_region
      _
    $region25: #{tpu_custom_call.1} parent=1 // pred_fallthru
      _
    // Predicated region
    $region26: #{tpu_custom_call.1} parent=1 // pred_check
      _
    $region27: #{tpu_custom_call.1} parent=1 // pred_check_branch
      %69 = sbr.rel (0) target = $region29
    $region28: #{tpu_custom_call.1} parent=1 // pred_region
      _
    $region29: #{tpu_custom_call.1} parent=1 // pred_fallthru
      _
    // Predicated region
    $region30: #{tpu_custom_call.1} parent=1 // pred_check
      _
    $region31: #{tpu_custom_call.1} parent=1 // pred_check_branch
      %71 = sbr.rel (0) target = $region33
    $region32: #{tpu_custom_call.1} parent=1 // pred_region
      %72 = dma.done [#allocation3], 256
    $region33: #{tpu_custom_call.1} parent=1 // pred_fallthru
      _
    // Predicated region
    $region34: #{tpu_custom_call.1} parent=1 // pred_check
      _
    $region35: #{tpu_custom_call.1} parent=1 // pred_check_branch
      %74 = sbr.rel (0) target = $region37
    $region36: #{tpu_custom_call.1} parent=1 // pred_region
      %75 = dma.done [#allocation6], 1024
    $region37: #{tpu_custom_call.1} parent=1 // pred_fallthru
      _
    // Predicated region
    $region38: #{tpu_custom_call.1} parent=1 // pred_check
      _
    $region39: #{tpu_custom_call.1} parent=1 // pred_check_branch
      %77 = sbr.rel (0) target = $region41
    $region40: #{tpu_custom_call.1} parent=1 // pred_region
      %78 = dma.done [#allocation6], 1024
    $region41: #{tpu_custom_call.1} parent=1 // pred_fallthru
      _
    // Predicated region
    $region42: #{tpu_custom_call.1} parent=1 // pred_check
      _
    $region43: #{tpu_custom_call.1} parent=1 // pred_check_branch
      %80 = sbr.rel (0) target = $region45
    $region44: #{tpu_custom_call.1} parent=1 // pred_region
      %81 = dma.done [#allocation9], 1024
    $region45: #{tpu_custom_call.1} parent=1 // pred_fallthru
      _
    %v83 = vld [vmem:[#allocation2] sm:$0xff]
    %v84 = vld [vmem:[#allocation2 + $0x8] sm:$0xff]
    %v85 = vpack.c.bf16 %v84, %v83
    %v86 = vld [vmem:[#allocation5] sm:$0xf]
    %v87 = vld [vmem:[#allocation5 + $0x4] sm:$0xf]
    %v88 = vld [vmem:[#allocation5 + $0x8] sm:$0xf]
    %v89 = vld [vmem:[#allocation5 + $0xc] sm:$0xf]
    %v90 = vld [vmem:[#allocation5 + $0x10] sm:$0xf]
    %v91 = vld [vmem:[#allocation5 + $0x14] sm:$0xf]
    %v92 = vld [vmem:[#allocation5 + $0x18] sm:$0xf]
    %v93 = vld [vmem:[#allocation5 + $0x1c] sm:$0xf]
    %v94 = vld [vmem:[#allocation5 + $0x20] sm:$0xf]
    %v95 = vld [vmem:[#allocation5 + $0x24] sm:$0xf]
    %v96 = vld [vmem:[#allocation5 + $0x28] sm:$0xf]
    %v97 = vld [vmem:[#allocation5 + $0x2c] sm:$0xf]
    %v98 = vld [vmem:[#allocation5 + $0x30] sm:$0xf]
    %v99 = vld [vmem:[#allocation5 + $0x34] sm:$0xf]
    %v100 = vld [vmem:[#allocation5 + $0x38] sm:$0xf]
    %v101 = vld [vmem:[#allocation5 + $0x3c] sm:$0xf]
    %v102 = vld [vmem:[%s4] sm:$0x1]
    %v104 = vlaneseq
    %v105 = vshrl.u32 %v104, 7
    %v106 = vsub.s32 0, %v105
    %v107 = vrot.slane %v102, %v106
    %v125 = vunpack.c.l.b16 %v86
    %v126 = vunpack.c.l.b16 %v87
    %v127 = vunpack.c.l.b16 %v88
    %v128 = vunpack.c.l.b16 %v89
    %v129 = vunpack.c.l.b16 %v90
    %v130 = vunpack.c.l.b16 %v91
    %v131 = vunpack.c.l.b16 %v92
    %v132 = vunpack.c.l.b16 %v93
    %v133 = vunpack.c.l.b16 %v94
    %v134 = vunpack.c.l.b16 %v95
    %v135 = vunpack.c.l.b16 %v96
    %v136 = vunpack.c.l.b16 %v97
    %v137 = vunpack.c.l.b16 %v98
    %v138 = vunpack.c.l.b16 %v99
    %v139 = vunpack.c.l.b16 %v100
    %v140 = vunpack.c.l.b16 %v101
    %v141 = vpack.c.b16 %v126, %v125
    %v142 = vpack.c.b16 %v128, %v127
    %v143 = vpack.c.b16 %v130, %v129
    %v144 = vpack.c.b16 %v132, %v131
    %v145 = vpack.c.b16 %v134, %v133
    %v146 = vpack.c.b16 %v136, %v135
    %v147 = vpack.c.b16 %v138, %v137
    %v148 = vpack.c.b16 %v140, %v139
    %157 = vmatprep.subr.bf16.mxu0 0
    %158 = vmatpush1.bf16.msra.mxu0 %v141
    %159 = vmatprep.subr.bf16.mxu0 0
    %160 = vmatpush1.bf16.msra.mxu0 %v142
    %161 = vmatprep.subr.bf16.mxu0 0
    %162 = vmatpush1.bf16.msra.mxu0 %v143
    %163 = vmatprep.subr.bf16.mxu0 0
    %164 = vmatpush1.bf16.msra.mxu0 %v144
    %165 = vmatprep.subr.bf16.mxu0 0
    %166 = vmatpush1.bf16.msra.mxu0 %v145
    %167 = vmatprep.subr.bf16.mxu0 0
    %168 = vmatpush1.bf16.msra.mxu0 %v146
    %169 = vmatprep.subr.bf16.mxu0 0
    %170 = vmatpush1.bf16.msra.mxu0 %v147
    %171 = vmatprep.subr.bf16.mxu0 0
    %172 = vmatpush1.bf16.msra.mxu0 %v148
    %173 = vmatprep.subr.bf16.mxu0 0
    %174 = vmatpush1.bf16.msra.mxu0 0
    %175 = vmatprep.subr.bf16.mxu0 0
    %176 = vmatpush1.bf16.msra.mxu0 0
    %177 = vmatprep.subr.bf16.mxu0 0
    %178 = vmatpush1.bf16.msra.mxu0 0
    %179 = vmatprep.subr.bf16.mxu0 0
    %180 = vmatpush1.bf16.msra.mxu0 0
    %181 = vmatprep.subr.bf16.mxu0 0
    %182 = vmatpush1.bf16.msra.mxu0 0
    %183 = vmatprep.subr.bf16.mxu0 0
    %184 = vmatpush1.bf16.msra.mxu0 0
    %185 = vmatprep.subr.bf16.mxu0 0
    %186 = vmatpush1.bf16.msra.mxu0 0
    %187 = vmatprep.subr.bf16.mxu0 0
    %188 = vmatpush1.bf16.msra.mxu0 0
    %189 = vmatprep.mubr.bf16.mxu0 0
    %190 = vmatmul.mubr.bf16.gmra.mrb[0].mxu0 %v85
    %v191 = vpop.f32.mrb[0].mxu0
    %v192 = vadd.f32 %v107, %v191
    %v193 = vpop.f32.mrb[0].mxu0
    %v194 = vpop.f32.mrb[0].mxu0
    %v195 = vadd.f32 %v107, %v194
    %v196 = vpop.f32.mrb[0].mxu0
    %197 = vdwg.mxu0
    %v198 = vmax.f32 %v192, 0.0
    %v199 = vmax.f32 %v195, 0.0
    %v200 = vpack.c.bf16 %v199, %v198
    %v201 = vld [vmem:[#allocation7] sm:$0xf]
    %v202 = vld [vmem:[#allocation7 + $0x4] sm:$0xf]
    %v203 = vld [vmem:[#allocation7 + $0x8] sm:$0xf]
    %v204 = vld [vmem:[#allocation7 + $0xc] sm:$0xf]
    %v205 = vld [vmem:[#allocation7 + $0x10] sm:$0xf]
    %v206 = vld [vmem:[#allocation7 + $0x14] sm:$0xf]
    %v207 = vld [vmem:[#allocation7 + $0x18] sm:$0xf]
    %v208 = vld [vmem:[#allocation7 + $0x1c] sm:$0xf]
    %v209 = vld [vmem:[#allocation7 + $0x20] sm:$0xf]
    %v210 = vld [vmem:[#allocation7 + $0x24] sm:$0xf]
    %v211 = vld [vmem:[#allocation7 + $0x28] sm:$0xf]
    %v212 = vld [vmem:[#allocation7 + $0x2c] sm:$0xf]
    %v213 = vld [vmem:[#allocation7 + $0x30] sm:$0xf]
    %v214 = vld [vmem:[#allocation7 + $0x34] sm:$0xf]
    %v215 = vld [vmem:[#allocation7 + $0x38] sm:$0xf]
    %v216 = vld [vmem:[#allocation7 + $0x3c] sm:$0xf]
    %v217 = vld [vmem:[%s5] sm:$0x1]
    %v219 = vlaneseq
    %v220 = vshrl.u32 %v219, 7
    %v221 = vsub.s32 0, %v220
    %v222 = vrot.slane %v217, %v221
    %v240 = vunpack.c.l.b16 %v201
    %v241 = vunpack.c.l.b16 %v202
    %v242 = vunpack.c.l.b16 %v203
    %v243 = vunpack.c.l.b16 %v204
    %v244 = vunpack.c.l.b16 %v205
    %v245 = vunpack.c.l.b16 %v206
    %v246 = vunpack.c.l.b16 %v207
    %v247 = vunpack.c.l.b16 %v208
    %v248 = vunpack.c.l.b16 %v209
    %v249 = vunpack.c.l.b16 %v210
    %v250 = vunpack.c.l.b16 %v211
    %v251 = vunpack.c.l.b16 %v212
    %v252 = vunpack.c.l.b16 %v213
    %v253 = vunpack.c.l.b16 %v214
    %v254 = vunpack.c.l.b16 %v215
    %v255 = vunpack.c.l.b16 %v216
    %v256 = vpack.c.b16 %v241, %v240
    %v257 = vpack.c.b16 %v243, %v242
    %v258 = vpack.c.b16 %v245, %v244
    %v259 = vpack.c.b16 %v247, %v246
    %v260 = vpack.c.b16 %v249, %v248
    %v261 = vpack.c.b16 %v251, %v250
    %v262 = vpack.c.b16 %v253, %v252
    %v263 = vpack.c.b16 %v255, %v254
    %272 = vmatprep.subr.bf16.mxu0 0
    %273 = vmatpush1.bf16.msra.mxu0 %v256
    %274 = vmatprep.subr.bf16.mxu0 0
    %275 = vmatpush1.bf16.msra.mxu0 %v257
    %276 = vmatprep.subr.bf16.mxu0 0
    %277 = vmatpush1.bf16.msra.mxu0 %v258
    %278 = vmatprep.subr.bf16.mxu0 0
    %279 = vmatpush1.bf16.msra.mxu0 %v259
    %280 = vmatprep.subr.bf16.mxu0 0
    %281 = vmatpush1.bf16.msra.mxu0 %v260
    %282 = vmatprep.subr.bf16.mxu0 0
    %283 = vmatpush1.bf16.msra.mxu0 %v261
    %284 = vmatprep.subr.bf16.mxu0 0
    %285 = vmatpush1.bf16.msra.mxu0 %v262
    %286 = vmatprep.subr.bf16.mxu0 0
    %287 = vmatpush1.bf16.msra.mxu0 %v263
    %288 = vmatprep.subr.bf16.mxu0 0
    %289 = vmatpush1.bf16.msra.mxu0 0
    %290 = vmatprep.subr.bf16.mxu0 0
    %291 = vmatpush1.bf16.msra.mxu0 0
    %292 = vmatprep.subr.bf16.mxu0 0
    %293 = vmatpush1.bf16.msra.mxu0 0
    %294 = vmatprep.subr.bf16.mxu0 0
    %295 = vmatpush1.bf16.msra.mxu0 0
    %296 = vmatprep.subr.bf16.mxu0 0
    %297 = vmatpush1.bf16.msra.mxu0 0
    %298 = vmatprep.subr.bf16.mxu0 0
    %299 = vmatpush1.bf16.msra.mxu0 0
    %300 = vmatprep.subr.bf16.mxu0 0
    %301 = vmatpush1.bf16.msra.mxu0 0
    %302 = vmatprep.subr.bf16.mxu0 0
    %303 = vmatpush1.bf16.msra.mxu0 0
    %304 = vmatprep.mubr.bf16.mxu0 0
    %305 = vmatmul.mubr.bf16.gmra.mrb[0].mxu0 %v200
    %v306 = vpop.f32.mrb[0].mxu0
    %v307 = vadd.f32 %v222, %v306
    %v308 = vpop.f32.mrb[0].mxu0
    %v309 = vpop.f32.mrb[0].mxu0
    %v310 = vadd.f32 %v222, %v309
    %v311 = vpop.f32.mrb[0].mxu0
    %312 = vdwg.mxu0
    %v313 = vmax.f32 %v307, 0.0
    %v314 = vmax.f32 %v310, 0.0
    %v315 = vpack.c.bf16 %v314, %v313
    %v316 = vld [vmem:[#allocation8] sm:$0xf]
    %v317 = vld [vmem:[#allocation8 + $0x4] sm:$0xf]
    %v318 = vld [vmem:[#allocation8 + $0x8] sm:$0xf]
    %v319 = vld [vmem:[#allocation8 + $0xc] sm:$0xf]
    %v320 = vld [vmem:[#allocation8 + $0x10] sm:$0xf]
    %v321 = vld [vmem:[#allocation8 + $0x14] sm:$0xf]
    %v322 = vld [vmem:[#allocation8 + $0x18] sm:$0xf]
    %v323 = vld [vmem:[#allocation8 + $0x1c] sm:$0xf]
    %v324 = vld [vmem:[#allocation8 + $0x20] sm:$0xf]
    %v325 = vld [vmem:[#allocation8 + $0x24] sm:$0xf]
    %v326 = vld [vmem:[#allocation8 + $0x28] sm:$0xf]
    %v327 = vld [vmem:[#allocation8 + $0x2c] sm:$0xf]
    %v328 = vld [vmem:[#allocation8 + $0x30] sm:$0xf]
    %v329 = vld [vmem:[#allocation8 + $0x34] sm:$0xf]
    %v330 = vld [vmem:[#allocation8 + $0x38] sm:$0xf]
    %v331 = vld [vmem:[#allocation8 + $0x3c] sm:$0xf]
    %v332 = vld [vmem:[%s6] sm:$0x1]
    %v334 = vlaneseq
    %v335 = vshrl.u32 %v334, 7
    %v336 = vsub.s32 0, %v335
    %v337 = vrot.slane %v332, %v336
    %v355 = vunpack.c.l.b16 %v316
    %v356 = vunpack.c.l.b16 %v317
    %v357 = vunpack.c.l.b16 %v318
    %v358 = vunpack.c.l.b16 %v319
    %v359 = vunpack.c.l.b16 %v320
    %v360 = vunpack.c.l.b16 %v321
    %v361 = vunpack.c.l.b16 %v322
    %v362 = vunpack.c.l.b16 %v323
    %v363 = vunpack.c.l.b16 %v324
    %v364 = vunpack.c.l.b16 %v325
    %v365 = vunpack.c.l.b16 %v326
    %v366 = vunpack.c.l.b16 %v327
    %v367 = vunpack.c.l.b16 %v328
    %v368 = vunpack.c.l.b16 %v329
    %v369 = vunpack.c.l.b16 %v330
    %v370 = vunpack.c.l.b16 %v331
    %v371 = vpack.c.b16 %v356, %v355
    %v372 = vpack.c.b16 %v358, %v357
    %v373 = vpack.c.b16 %v360, %v359
    %v374 = vpack.c.b16 %v362, %v361
    %v375 = vpack.c.b16 %v364, %v363
    %v376 = vpack.c.b16 %v366, %v365
    %v377 = vpack.c.b16 %v368, %v367
    %v378 = vpack.c.b16 %v370, %v369
    %387 = vmatprep.subr.bf16.mxu0 0
    %388 = vmatpush1.bf16.msra.mxu0 %v371
    %389 = vmatprep.subr.bf16.mxu0 0
    %390 = vmatpush1.bf16.msra.mxu0 %v372
    %391 = vmatprep.subr.bf16.mxu0 0
    %392 = vmatpush1.bf16.msra.mxu0 %v373
    %393 = vmatprep.subr.bf16.mxu0 0
    %394 = vmatpush1.bf16.msra.mxu0 %v374
    %395 = vmatprep.subr.bf16.mxu0 0
    %396 = vmatpush1.bf16.msra.mxu0 %v375
    %397 = vmatprep.subr.bf16.mxu0 0
    %398 = vmatpush1.bf16.msra.mxu0 %v376
    %399 = vmatprep.subr.bf16.mxu0 0
    %400 = vmatpush1.bf16.msra.mxu0 %v377
    %401 = vmatprep.subr.bf16.mxu0 0
    %402 = vmatpush1.bf16.msra.mxu0 %v378
    %403 = vmatprep.subr.bf16.mxu0 0
    %404 = vmatpush1.bf16.msra.mxu0 0
    %405 = vmatprep.subr.bf16.mxu0 0
    %406 = vmatpush1.bf16.msra.mxu0 0
    %407 = vmatprep.subr.bf16.mxu0 0
    %408 = vmatpush1.bf16.msra.mxu0 0
    %409 = vmatprep.subr.bf16.mxu0 0
    %410 = vmatpush1.bf16.msra.mxu0 0
    %411 = vmatprep.subr.bf16.mxu0 0
    %412 = vmatpush1.bf16.msra.mxu0 0
    %413 = vmatprep.subr.bf16.mxu0 0
    %414 = vmatpush1.bf16.msra.mxu0 0
    %415 = vmatprep.subr.bf16.mxu0 0
    %416 = vmatpush1.bf16.msra.mxu0 0
    %417 = vmatprep.subr.bf16.mxu0 0
    %418 = vmatpush1.bf16.msra.mxu0 0
    %419 = vmatprep.mubr.bf16.mxu0 0
    %420 = vmatmul.mubr.bf16.gmra.mrb[0].mxu0 %v315
    %v421 = vpop.f32.mrb[0].mxu0
    %v422 = vadd.f32 %v337, %v421
    %v423 = vpop.f32.mrb[0].mxu0
    %v424 = vpop.f32.mrb[0].mxu0
    %v425 = vadd.f32 %v337, %v424
    %v426 = vpop.f32.mrb[0].mxu0
    %427 = vdwg.mxu0
    %428 = vst [vmem:[#allocation10] sm:$0xff] %v422
    %429 = vst [vmem:[#allocation10 + $0x8] sm:$0xff] %v425
    // Predicated region
    $region46: #{tpu_custom_call.1} parent=1 // pred_check
      _
    $region47: #{tpu_custom_call.1} parent=1 // pred_check_branch
      %431 = sbr.rel (0) target = $region49
    $region48: #{tpu_custom_call.1} parent=1 // pred_region
      %s433 = ssub.s32 256, 256
      %434 = vsyncadd [#allocation4], %s433
      %s435 = sshll.u32 [#allocation10], 4
      %s436 = int_to_ptr.vmem [resolvable:$true] %s435
      %441 = dma.vmem_to_hbm [thread:$0]  %s436, 256, %s7, [#allocation4], 128, 128, 8
    $region49: #{tpu_custom_call.1} parent=1 // pred_fallthru
      _
    // Predicated region
    $region50: #{tpu_custom_call.1} parent=1 // pred_check
      _
    $region51: #{tpu_custom_call.1} parent=1 // pred_check_branch
      %443 = sbr.rel (0) target = $region53
    $region52: #{tpu_custom_call.1} parent=1 // pred_region
      %444 = dma.done [#allocation4], 256
    $region53: #{tpu_custom_call.1} parent=1 // pred_fallthru
      _
    %445 = vsyncpa [#allocation3], 1
    %446 = vsyncpa [#allocation6], 1
    %447 = vsyncpa [#allocation9], 1
    %448 = vsyncpa [#allocation4], 1

</llo_original>
